<compile_context>
chip_gen: v5e
topology: v5e:2x2
jax: 0.10.0
libtpu: 0.0.40
codegen_flags: <defaults>
</compile_context>

<pallas_src>
import jax
import jax.numpy as jnp
from jax.experimental import pallas as pl
from jax.experimental.pallas import tpu as pltpu


def _round_up(x, m):
    return (x + m - 1) // m * m


def _fused_encoder_kernel(x_ref, w1_ref, b1_ref, w2_ref, b2_ref, z_ref):
    """One (view, batch-tile) step: z = leaky_relu(x @ W1 + b1) @ W2 + b2.

    All dims arrive padded (F/H/L multiples of 128, batch tile multiple of 8),
    so both matmuls use full MXU planes and the output store is lane-dense.
    """
    x = x_ref[...]                                            # (tile_m, F_pad)
    h = jnp.dot(x, w1_ref[...],
                preferred_element_type=jnp.float32) + b1_ref[...]
    # torch.nn.LeakyReLU default negative_slope = 0.01, kept in f32.
    h = jnp.where(h > 0, h, 0.01 * h)
    z = jnp.dot(h, w2_ref[...],
                preferred_element_type=jnp.float32) + b2_ref[...]
    z_ref[...] = z.astype(z_ref.dtype)


def fused_encoder_forward(x_stacked, w1s, b1s, w2s, b2s, *, tile_m):
    """Single pallas_call covering all views and batch tiles.

    x_stacked : (V, B_pad, F_pad)  zero-padded, stacked views
    w1s       : (V, F_pad, H_pad)
    b1s       : (V, 1,     H_pad)
    w2s       : (V, H_pad, L_pad)
    b2s       : (V, 1,     L_pad)
    returns   : (V, B_pad, L_pad)
    """
    V, B_pad, F_pad = x_stacked.shape
    H_pad = w1s.shape[2]
    L_pad = w2s.shape[2]
    assert B_pad % tile_m == 0

    grid = (V, B_pad // tile_m)
    return pl.pallas_call(
        _fused_encoder_kernel,
        out_shape=jax.ShapeDtypeStruct((V, B_pad, L_pad), x_stacked.dtype),
        grid_spec=pltpu.PrefetchScalarGridSpec(
            num_scalar_prefetch=0,
            grid=grid,
            in_specs=[
                # x tile: leading view dim squeezed out of the kernel refs.
                pl.BlockSpec((None, tile_m, F_pad), lambda v, i: (v, i, 0)),
                # Per-view weights/biases: block index varies with v, so the
                # default double-buffering usefully prefetches view v+1's
                # weights under view v's compute.
                pl.BlockSpec((None, F_pad, H_pad), lambda v, i: (v, 0, 0)),
                pl.BlockSpec((None, 1, H_pad), lambda v, i: (v, 0, 0)),
                pl.BlockSpec((None, H_pad, L_pad), lambda v, i: (v, 0, 0)),
                pl.BlockSpec((None, 1, L_pad), lambda v, i: (v, 0, 0)),
            ],
            out_specs=pl.BlockSpec((None, tile_m, L_pad),
                                   lambda v, i: (v, i, 0)),
        ),
        # Both grid axes are independent -> megacore-shardable on v7x.
        # NOTE: at realistic F/H (thousands) on v7x (64 MiB VMEM), re-derive
        # tile_m and set vmem_limit_bytes explicitly.
        compiler_params=pltpu.CompilerParams(
            dimension_semantics=("parallel", "parallel")),
    )(x_stacked, w1s, b1s, w2s, b2s)


def init_encoder_params(key, feature_size, hidden, latent_dims,
                        dtype=jnp.float32):
    """Deterministic parameter init (stand-in for torch.nn.Linear init)."""
    k1, k2, k3, k4 = jax.random.split(key, 4)
    lim1 = 1.0 / jnp.sqrt(feature_size)
    lim2 = 1.0 / jnp.sqrt(hidden)
    w1 = jax.random.uniform(k1, (feature_size, hidden), dtype, -lim1, lim1)
    b1 = jax.random.uniform(k2, (hidden,), dtype, -lim1, lim1)
    w2 = jax.random.uniform(k3, (hidden, latent_dims), dtype, -lim2, lim2)
    b2 = jax.random.uniform(k4, (latent_dims,), dtype, -lim2, lim2)
    return w1, b1, w2, b2


class DCCA_NOI_Pallas:
    """JAX/Pallas port of DCCA_NOI.forward (== encode over both views)."""

    def __init__(self, latent_dims, N, feature_sizes, hidden=32,
                 rho=0.2, eps=1e-3, max_tile_m=256, key=None):
        if rho < 0 or rho > 1:
            raise ValueError(f"rho should be between 0 and 1. rho={rho}")
        if key is None:
            key = jax.random.PRNGKey(0)
        self.latent_dims = latent_dims
        self.N = N
        self.rho = rho
        self.eps = eps
        self.hidden = hidden
        # Cap batch tile rows (keeps v5e happy; raise toward 512 on v6e for
        # very large batches).
        self.max_tile_m = max_tile_m
        self.feature_sizes = tuple(feature_sizes)

        keys = jax.random.split(key, len(feature_sizes))
        self.encoder_params = [
            init_encoder_params(k, fs, hidden, latent_dims)
            for k, fs in zip(keys, feature_sizes)
        ]

        # --- one-time host-side padding of the parameters -------------------
        # Pad K/N dims of both linear layers to multiples of 128 so each MXU
        # push does full-width work and the output is lane-dense.
        self.F_pad = _round_up(max(feature_sizes), 128)
        self.H_pad = _round_up(hidden, 128)
        self.L_pad = _round_up(latent_dims, 128)

        w1s, b1s, w2s, b2s = [], [], [], []
        for (w1, b1, w2, b2), fs in zip(self.encoder_params, feature_sizes):
            w1s.append(jnp.zeros((self.F_pad, self.H_pad), w1.dtype)
                       .at[:fs, :hidden].set(w1))
            b1s.append(jnp.zeros((1, self.H_pad), b1.dtype)
                       .at[0, :hidden].set(b1))
            w2s.append(jnp.zeros((self.H_pad, self.L_pad), w2.dtype)
                       .at[:hidden, :latent_dims].set(w2))
            b2s.append(jnp.zeros((1, self.L_pad), b2.dtype)
                       .at[0, :latent_dims].set(b2))
        self.w1s = jnp.stack(w1s)        # (V, F_pad, H_pad)
        self.b1s = jnp.stack(b1s)        # (V, 1,     H_pad)
        self.w2s = jnp.stack(w2s)        # (V, H_pad, L_pad)
        self.b2s = jnp.stack(b2s)        # (V, 1,     L_pad)

        # TODO(synk): update_weights / update_covariances / objective.loss
        # (matrix inverse sqrt via eigendecomposition) are training-only and
        # not part of forward(), so they are not implemented as kernels.

    def _tiling(self, B):
        """Pick (tile_m, B_pad): big tiles, minimal zero-padding."""
        num_tiles = -(-B // self.max_tile_m)             # ceil div
        tile_m = _round_up(-(-B // num_tiles), 8)
        return tile_m, tile_m * num_tiles

    def forward(self, *views):
        assert len(views) == len(self.encoder_params)
        B = views[0].shape[0]
        dtype = views[0].dtype
        tile_m, B_pad = self._tiling(B)

        # Zero-pad and stack the views -> (V, B_pad, F_pad). Padding rows/cols
        # only produce values that are sliced off below.
        xs = []
        for x, fs in zip(views, self.feature_sizes):
            xs.append(jnp.zeros((B_pad, self.F_pad), dtype).at[:B, :fs].set(x))
        x_stacked = jnp.stack(xs)

        z = fused_encoder_forward(x_stacked, self.w1s, self.b1s,
                                  self.w2s, self.b2s, tile_m=tile_m)
        return tuple(z[i, :B, :self.latent_dims] for i in range(len(views)))

    __call__ = forward


def _reference_forward(model, *views):
    """Pure-jnp reference (unpadded parameters) for correctness check."""
    outs = []
    for x, (w1, b1, w2, b2) in zip(views, model.encoder_params):
        h = x @ w1 + b1
        h = jnp.where(h > 0, h, 0.01 * h)
        outs.append(h @ w2 + b2)
    return tuple(outs)


if __name__ == "__main__":
    key = jax.random.PRNGKey(0)
    k_x1, k_x2, k_params = jax.random.split(key, 3)

    batch = 16
    latent_dims = 8
    feature_sizes = (32, 40)   # per-view input feature sizes
    hidden = 32

    x1 = jax.random.normal(k_x1, (batch, feature_sizes[0]), jnp.float32)
    x2 = jax.random.normal(k_x2, (batch, feature_sizes[1]), jnp.float32)

    model = DCCA_NOI_Pallas(latent_dims=latent_dims, N=batch,
                            feature_sizes=feature_sizes, hidden=hidden,
                            key=k_params)

    z1, z2 = model(x1, x2)
    jax.block_until_ready((z1, z2))

    # sanity check against a pure-JAX reference
    r1, r2 = _reference_forward(model, x1, x2)
    assert z1.shape == (batch, latent_dims) and z2.shape == (batch, latent_dims)
    assert jnp.allclose(z1, r1, atol=1e-5) and jnp.allclose(z2, r2, atol=1e-5)

    print("KERNEL_OK")
</pallas_src>

<mosaic_0001>
module attributes {stable_mosaic.version = 11 : i64} {
  func.func @_fused_encoder_kernel(%arg0: i32, %arg1: i32, %arg2: memref<1x16x128xf32, #tpu.memory_space<vmem>>, %arg3: memref<1x128x128xf32, #tpu.memory_space<vmem>>, %arg4: memref<1x1x128xf32, #tpu.memory_space<vmem>>, %arg5: memref<1x128x128xf32, #tpu.memory_space<vmem>>, %arg6: memref<1x1x128xf32, #tpu.memory_space<vmem>>, %arg7: memref<1x16x128xf32, #tpu.memory_space<vmem>>) attributes {dimension_semantics = [#tpu.dimension_semantics<parallel>, #tpu.dimension_semantics<parallel>], iteration_bounds = array<i64: 2, 1>, scalar_prefetch = 0 : i64, scratch_operands = 0 : i64, tpu.core_type = #tpu.core_type<tc>, window_params = [{transform_indices = @transform_0, window_bounds = array<i64: 1, 16, 128>}, {transform_indices = @transform_1, window_bounds = array<i64: 1, 128, 128>}, {transform_indices = @transform_2, window_bounds = array<i64: 1, 1, 128>}, {transform_indices = @transform_3, window_bounds = array<i64: 1, 128, 128>}, {transform_indices = @transform_4, window_bounds = array<i64: 1, 1, 128>}, {transform_indices = @transform_5, window_bounds = array<i64: 1, 16, 128>}]} {
    %c0 = arith.constant 0 : index
    %c0_0 = arith.constant 0 : index
    %c0_1 = arith.constant 0 : index
    %0 = vector.load %arg2[%c0, %c0_0, %c0_1] : memref<1x16x128xf32, #tpu.memory_space<vmem>>, vector<1x16x128xf32>
    %1 = vector.shape_cast %0 : vector<1x16x128xf32> to vector<16x128xf32>
    %c0_2 = arith.constant 0 : index
    %c0_3 = arith.constant 0 : index
    %c0_4 = arith.constant 0 : index
    %2 = vector.load %arg3[%c0_2, %c0_3, %c0_4] : memref<1x128x128xf32, #tpu.memory_space<vmem>>, vector<1x128x128xf32>
    %3 = vector.shape_cast %2 : vector<1x128x128xf32> to vector<128x128xf32>
    %cst = arith.constant dense<0.000000e+00> : vector<16x128xf32>
    %4 = tpu.matmul %1, %3, %cst {dimension_numbers = #tpu.dot_dimension_numbers<[1], [0], [0], [1], [0, 0, 1, 1], [], []>} : vector<16x128xf32>, vector<128x128xf32>, vector<16x128xf32> -> vector<16x128xf32>
    %c0_5 = arith.constant 0 : index
    %c0_6 = arith.constant 0 : index
    %c0_7 = arith.constant 0 : index
    %5 = vector.load %arg4[%c0_5, %c0_6, %c0_7] : memref<1x1x128xf32, #tpu.memory_space<vmem>>, vector<1x1x128xf32>
    %6 = vector.shape_cast %5 : vector<1x1x128xf32> to vector<1x128xf32>
    %7 = vector.broadcast %6 : vector<1x128xf32> to vector<16x128xf32>
    %8 = arith.addf %4, %7 : vector<16x128xf32>
    %cst_8 = arith.constant 0.000000e+00 : f32
    %9 = vector.broadcast %cst_8 : f32 to vector<16x128xf32>
    %10 = arith.cmpf ogt, %8, %9 : vector<16x128xf32>
    %cst_9 = arith.constant 0.00999999977 : f32
    %11 = vector.broadcast %cst_9 : f32 to vector<16x128xf32>
    %12 = arith.mulf %11, %8 : vector<16x128xf32>
    %13 = arith.select %10, %8, %12 : vector<16x128xi1>, vector<16x128xf32>
    %c0_10 = arith.constant 0 : index
    %c0_11 = arith.constant 0 : index
    %c0_12 = arith.constant 0 : index
    %14 = vector.load %arg5[%c0_10, %c0_11, %c0_12] : memref<1x128x128xf32, #tpu.memory_space<vmem>>, vector<1x128x128xf32>
    %15 = vector.shape_cast %14 : vector<1x128x128xf32> to vector<128x128xf32>
    %cst_13 = arith.constant dense<0.000000e+00> : vector<16x128xf32>
    %16 = tpu.matmul %13, %15, %cst_13 {dimension_numbers = #tpu.dot_dimension_numbers<[1], [0], [0], [1], [0, 0, 1, 1], [], []>} : vector<16x128xf32>, vector<128x128xf32>, vector<16x128xf32> -> vector<16x128xf32>
    %c0_14 = arith.constant 0 : index
    %c0_15 = arith.constant 0 : index
    %c0_16 = arith.constant 0 : index
    %17 = vector.load %arg6[%c0_14, %c0_15, %c0_16] : memref<1x1x128xf32, #tpu.memory_space<vmem>>, vector<1x1x128xf32>
    %18 = vector.shape_cast %17 : vector<1x1x128xf32> to vector<1x128xf32>
    %19 = vector.broadcast %18 : vector<1x128xf32> to vector<16x128xf32>
    %20 = arith.addf %16, %19 : vector<16x128xf32>
    %c0_17 = arith.constant 0 : index
    %c0_18 = arith.constant 0 : index
    %c0_19 = arith.constant 0 : index
    %21 = vector.load %arg7[%c0_17, %c0_18, %c0_19] : memref<1x16x128xf32, #tpu.memory_space<vmem>>, vector<1x16x128xf32>
    %22 = vector.shape_cast %21 : vector<1x16x128xf32> to vector<16x128xf32>
    %23 = vector.shape_cast %20 : vector<16x128xf32> to vector<1x16x128xf32>
    tpu.vector_store %arg7[%c0_17, %c0_18, %c0_19], %23 {strides = array<i32>} : memref<1x16x128xf32, #tpu.memory_space<vmem>>, vector<1x16x128xf32>,
    return
  }
  func.func @transform_0(%arg0: i32, %arg1: i32) -> (i32, i32, i32) {
    %c0_i32 = arith.constant 0 : i32
    %c0_i32_0 = arith.constant 0 : i32
    return %arg0, %arg1, %c0_i32 : i32, i32, i32
  }
  func.func @transform_1(%arg0: i32, %arg1: i32) -> (i32, i32, i32) {
    %c0_i32 = arith.constant 0 : i32
    %c0_i32_0 = arith.constant 0 : i32
    %c0_i32_1 = arith.constant 0 : i32
    return %arg0, %c0_i32, %c0_i32_0 : i32, i32, i32
  }
  func.func @transform_2(%arg0: i32, %arg1: i32) -> (i32, i32, i32) {
    %c0_i32 = arith.constant 0 : i32
    %c0_i32_0 = arith.constant 0 : i32
    %c0_i32_1 = arith.constant 0 : i32
    return %arg0, %c0_i32, %c0_i32_0 : i32, i32, i32
  }
  func.func @transform_3(%arg0: i32, %arg1: i32) -> (i32, i32, i32) {
    %c0_i32 = arith.constant 0 : i32
    %c0_i32_0 = arith.constant 0 : i32
    %c0_i32_1 = arith.constant 0 : i32
    return %arg0, %c0_i32, %c0_i32_0 : i32, i32, i32
  }
  func.func @transform_4(%arg0: i32, %arg1: i32) -> (i32, i32, i32) {
    %c0_i32 = arith.constant 0 : i32
    %c0_i32_0 = arith.constant 0 : i32
    %c0_i32_1 = arith.constant 0 : i32
    return %arg0, %c0_i32, %c0_i32_0 : i32, i32, i32
  }
  func.func @transform_5(%arg0: i32, %arg1: i32) -> (i32, i32, i32) {
    %c0_i32 = arith.constant 0 : i32
    %c0_i32_0 = arith.constant 0 : i32
    return %arg0, %arg1, %c0_i32 : i32, i32, i32
  }
}

</mosaic_0001>

<llo_original>
// kernel: tpu_custom_call.1
$region0: #{tpu_custom_call.1}
  #allocation0 [shape = 'u32[]', space=smem, size = 0x4, offset = 0x4, fixed_abs, tag = 'smem constant byte address 0x4 - core index']
  #allocation1 [shape = 'u32[72,128]{1,0:T(1,128)}', space=vmem, size = 0x9000, scoped, tag = 'internal scratch']
  %s0 = inlined_call_operand.hbm [shape: f32[2,16,128], index: 0, kind: input, shape index: {}]
  %s1 = inlined_call_operand.hbm [shape: f32[2,128,128], index: 1, kind: input, shape index: {}]
  %s2 = inlined_call_operand.hbm [shape: f32[2,1,128], index: 2, kind: input, shape index: {}]
  %s3 = inlined_call_operand.hbm [shape: f32[2,128,128], index: 3, kind: input, shape index: {}]
  %s4 = inlined_call_operand.vmem [shape: f32[2,1,128], index: 4, kind: input, shape index: {}]
  %s5 = inlined_call_operand.hbm [shape: f32[2,16,128], index: 5, kind: output, shape index: {}]
  %s6 = sld [smem:[#allocation0]]
  $region69: #{tpu_custom_call.1} parent=0
    _
  %s8 = ssub.s32 1, %s6
  %s9 = scalar_select 0, %s8, %s6
  $region1: #{tpu_custom_call.1} parent=0
    #allocation2 [shape = 'u8[16384]{0}', space=vmem, size = 0x4000, scoped, tag = 'input window, operand 0']
    #allocation3 [shape = 's32[2]{0}', space=sflag, size = 0x8, scoped, tag = 'scoped memory for tpu_custom_call.1']
    #allocation4 [shape = 's32[2]{0}', space=sflag, size = 0x8, scoped, tag = 'scoped memory for tpu_custom_call.1']
    #allocation5 [shape = 'u8[131072]{0}', space=vmem, size = 0x20000, scoped, tag = 'input window, operand 1']
    #allocation6 [shape = 's32[2]{0}', space=sflag, size = 0x8, scoped, tag = 'scoped memory for tpu_custom_call.1']
    #allocation7 [shape = 'u8[1024]{0}', space=vmem, size = 0x400, scoped, tag = 'input window, operand 2']
    #allocation8 [shape = 'u8[131072]{0}', space=vmem, size = 0x20000, scoped, tag = 'input window, operand 3']
    #allocation9 [shape = 's32[2]{0}', space=sflag, size = 0x8, scoped, tag = 'scoped memory for tpu_custom_call.1']
    #allocation10 [shape = 'u8[16384]{0}', space=vmem, size = 0x4000, scoped, tag = 'output window, operand 0']
    %10 = vsyncpa [#allocation3], 0
    %s11 = scalar_lea.sflag [#allocation3], 1
    %12 = vsyncpa %s11, 0
    %13 = vsyncpa [#allocation6], 0
    %s14 = scalar_lea.sflag [#allocation6], 1
    %15 = vsyncpa %s14, 0
    %16 = vsyncpa [#allocation9], 0
    %s17 = scalar_lea.sflag [#allocation9], 1
    %18 = vsyncpa %s17, 0
    %19 = vsyncpa [#allocation4], 0
    %s20 = scalar_lea.sflag [#allocation4], 1
    %21 = vsyncpa %s20, 0
    loop: start=0, step=1, limit=4
    $region2: #{tpu_custom_call.1} parent=1 // loop_pre_header
      _
    $region3: #{tpu_custom_call.1} parent=1 // loop_header
      %s23 = sphi 0, %s27
      %p24 = scmp.ge.s32.totalorder %s23, 4
      %s30 = sphi 0, %s42
      %s31 = sphi 0, %s38
      %s32 = sphi 0, %s30
      %s33 = sphi 0, %s31
      %s34 = sphi 0, %s32
      %s35 = sphi 0, %s33
      %s47 = sphi 0, %s49
      %s50 = sphi 0, %s47
      %s51 = sphi 0, %s50
      %s67 = sphi 0, %s51
      %s73 = sphi 0, %s75
      %s76 = sphi 0, %s73
      %s77 = sphi 0, %s76
      %s93 = sphi 0, %s77
      %s99 = sphi 0, %s101
      %s102 = sphi 0, %s99
      %s103 = sphi 0, %s102
      %s119 = sphi 0, %s103
      %s125 = sphi 0, %s127
      %s128 = sphi 0, %s125
      %s129 = sphi 0, %s128
      %s145 = sphi 0, %s129
      %s151 = sphi 0, %s153
      %s154 = sphi 0, %s151
      %s155 = sphi 0, %s154
      %s171 = sphi 0, %s155
      %s179 = sphi 0, %s181
      %s182 = sphi 0, %s179
      %s183 = sphi 0, %s182
      %s199 = sphi 0, %s183
    $region4: #{tpu_custom_call.1} parent=1 // loop_header_branch
      %26 = sbr.rel (%p24) target = $region8
    $region5: #{tpu_custom_call.1} parent=1 // loop_body
      %s28 = ssub.s32 %s23, 1
      %s29 = ssub.s32 %s23, 2
      %s36 = sadd.s32 1, %s31
      %p37 = scmp.ge.s32.totalorder %s36, 1
      %s38 = scalar_select %p37, 0, %s36
      %s39 = sadd.s32 1, %s30
      %s40 = scalar_select %p37, %s39, %s30
      %p41 = scmp.ge.s32.totalorder %s40, 2
      %s42 = scalar_select %p41, 0, %s40
      %s43 = ssub.s32 %s30, %s42
      %s44 = ssub.s32 %s31, %s38
      %s45 = sor.u32 %s43, %s44
      %p46 = scmp.eq.s32.totalorder %s45, 0
      %s48 = sadd.s32 %s47, 1
      %s49 = scalar_select %p46, %s47, %s48
      %p52 = pneg %p46
      %p53 = scmp.eq.s32.totalorder %s23, 1
      %p54 = por %p52, %p53
      %p55 = scmp.ne.s32.totalorder %s47, %s50
      %p56 = scmp.eq.s32.totalorder %s23, 0
      %p57 = por %p55, %p56
      %p58 = scmp.ne.s32.totalorder %s47, %s50
      %p59 = scmp.eq.s32.totalorder %s28, 1
      %p60 = por %p58, %p59
      %p61 = scmp.ne.s32.totalorder %s50, %s51
      %p62 = scmp.eq.s32.totalorder %s28, 0
      %p63 = por %p61, %p62
      %p64 = scmp.ne.s32.totalorder %s50, %s51
      %p65 = scmp.eq.s32.totalorder %s29, 1
      %p66 = por %p64, %p65
      %p68 = scmp.ne.s32.totalorder %s51, %s67
      %p69 = scmp.eq.s32.totalorder %s29, 0
      %p70 = por %p68, %p69
      %s71 = ssub.s32 %s30, %s42
      %p72 = scmp.eq.s32.totalorder %s71, 0
      %s74 = sadd.s32 %s73, 1
      %s75 = scalar_select %p72, %s73, %s74
      %p78 = pneg %p72
      %p79 = scmp.eq.s32.totalorder %s23, 1
      %p80 = por %p78, %p79
      %p81 = scmp.ne.s32.totalorder %s73, %s76
      %p82 = scmp.eq.s32.totalorder %s23, 0
      %p83 = por %p81, %p82
      %p84 = scmp.ne.s32.totalorder %s73, %s76
      %p85 = scmp.eq.s32.totalorder %s28, 1
      %p86 = por %p84, %p85
      %p87 = scmp.ne.s32.totalorder %s76, %s77
      %p88 = scmp.eq.s32.totalorder %s28, 0
      %p89 = por %p87, %p88
      %p90 = scmp.ne.s32.totalorder %s76, %s77
      %p91 = scmp.eq.s32.totalorder %s29, 1
      %p92 = por %p90, %p91
      %p94 = scmp.ne.s32.totalorder %s77, %s93
      %p95 = scmp.eq.s32.totalorder %s29, 0
      %p96 = por %p94, %p95
      %s97 = ssub.s32 %s30, %s42
      %p98 = scmp.eq.s32.totalorder %s97, 0
      %s100 = sadd.s32 %s99, 1
      %s101 = scalar_select %p98, %s99, %s100
      %p104 = pneg %p98
      %p105 = scmp.eq.s32.totalorder %s23, 1
      %p106 = por %p104, %p105
      %p107 = scmp.ne.s32.totalorder %s99, %s102
      %p108 = scmp.eq.s32.totalorder %s23, 0
      %p109 = por %p107, %p108
      %p110 = scmp.ne.s32.totalorder %s99, %s102
      %p111 = scmp.eq.s32.totalorder %s28, 1
      %p112 = por %p110, %p111
      %p113 = scmp.ne.s32.totalorder %s102, %s103
      %p114 = scmp.eq.s32.totalorder %s28, 0
      %p115 = por %p113, %p114
      %p116 = scmp.ne.s32.totalorder %s102, %s103
      %p117 = scmp.eq.s32.totalorder %s29, 1
      %p118 = por %p116, %p117
      %p120 = scmp.ne.s32.totalorder %s103, %s119
      %p121 = scmp.eq.s32.totalorder %s29, 0
      %p122 = por %p120, %p121
      %s123 = ssub.s32 %s30, %s42
      %p124 = scmp.eq.s32.totalorder %s123, 0
      %s126 = sadd.s32 %s125, 1
      %s127 = scalar_select %p124, %s125, %s126
      %p130 = pneg %p124
      %p131 = scmp.eq.s32.totalorder %s23, 1
      %p132 = por %p130, %p131
      %p133 = scmp.ne.s32.totalorder %s125, %s128
      %p134 = scmp.eq.s32.totalorder %s23, 0
      %p135 = por %p133, %p134
      %p136 = scmp.ne.s32.totalorder %s125, %s128
      %p137 = scmp.eq.s32.totalorder %s28, 1
      %p138 = por %p136, %p137
      %p139 = scmp.ne.s32.totalorder %s128, %s129
      %p140 = scmp.eq.s32.totalorder %s28, 0
      %p141 = por %p139, %p140
      %p142 = scmp.ne.s32.totalorder %s128, %s129
      %p143 = scmp.eq.s32.totalorder %s29, 1
      %p144 = por %p142, %p143
      %p146 = scmp.ne.s32.totalorder %s129, %s145
      %p147 = scmp.eq.s32.totalorder %s29, 0
      %p148 = por %p146, %p147
      %s149 = ssub.s32 %s30, %s42
      %p150 = scmp.eq.s32.totalorder %s149, 0
      %s152 = sadd.s32 %s151, 1
      %s153 = scalar_select %p150, %s151, %s152
      %p156 = pneg %p150
      %p157 = scmp.eq.s32.totalorder %s23, 1
      %p158 = por %p156, %p157
      %p159 = scmp.ne.s32.totalorder %s151, %s154
      %p160 = scmp.eq.s32.totalorder %s23, 0
      %p161 = por %p159, %p160
      %p162 = scmp.ne.s32.totalorder %s151, %s154
      %p163 = scmp.eq.s32.totalorder %s28, 1
      %p164 = por %p162, %p163
      %p165 = scmp.ne.s32.totalorder %s154, %s155
      %p166 = scmp.eq.s32.totalorder %s28, 0
      %p167 = por %p165, %p166
      %p168 = scmp.ne.s32.totalorder %s154, %s155
      %p169 = scmp.eq.s32.totalorder %s29, 1
      %p170 = por %p168, %p169
      %p172 = scmp.ne.s32.totalorder %s155, %s171
      %p173 = scmp.eq.s32.totalorder %s29, 0
      %p174 = por %p172, %p173
      %s175 = ssub.s32 %s30, %s42
      %s176 = ssub.s32 %s31, %s38
      %s177 = sor.u32 %s175, %s176
      %p178 = scmp.eq.s32.totalorder %s177, 0
      %s180 = sadd.s32 %s179, 1
      %s181 = scalar_select %p178, %s179, %s180
      %p184 = pneg %p178
      %p185 = scmp.eq.s32.totalorder %s23, 1
      %p186 = por %p184, %p185
      %p187 = scmp.ne.s32.totalorder %s179, %s182
      %p188 = scmp.eq.s32.totalorder %s23, 0
      %p189 = por %p187, %p188
      %p190 = scmp.ne.s32.totalorder %s179, %s182
      %p191 = scmp.eq.s32.totalorder %s28, 1
      %p192 = por %p190, %p191
      %p193 = scmp.ne.s32.totalorder %s182, %s183
      %p194 = scmp.eq.s32.totalorder %s28, 0
      %p195 = por %p193, %p194
      %p196 = scmp.ne.s32.totalorder %s182, %s183
      %p197 = scmp.eq.s32.totalorder %s29, 1
      %p198 = por %p196, %p197
      %p200 = scmp.ne.s32.totalorder %s183, %s199
      %p201 = scmp.eq.s32.totalorder %s29, 0
      %p202 = por %p200, %p201
      %p203 = scmp.le.s32.totalorder 1, %s23
      %p204 = scmp.lt.s32.totalorder %s23, 3
      %p205 = pnand %p203, %p204
      %p206 = pneg %p205
      // Predicated region
      $region9: #{tpu_custom_call.1} parent=5 // pred_check
        _
      $region10: #{tpu_custom_call.1} parent=5 // pred_check_branch
        %208 = sbr.rel (%p205) target = $region12
      $region11: #{tpu_custom_call.1} parent=5 // pred_region
        %s209 = ssub.s32 %s23, 1
      $region12: #{tpu_custom_call.1} parent=5 // pred_fallthru
        _
      %p210 = scmp.lt.s32.totalorder %s23, 2
      // Predicated region
      $region13: #{tpu_custom_call.1} parent=5 // pred_check
        %p211 = pneg %p210
      $region14: #{tpu_custom_call.1} parent=5 // pred_check_branch
        %213 = sbr.rel (%p211) target = $region16
      $region15: #{tpu_custom_call.1} parent=5 // pred_region
        // Predicated region
        $region17: #{tpu_custom_call.1} parent=15 // pred_check
          %p214 = pneg %p57
        $region18: #{tpu_custom_call.1} parent=15 // pred_check_branch
          %216 = sbr.rel (%p214) target = $region20
        $region19: #{tpu_custom_call.1} parent=15 // pred_region
          %s217 = sand.u32 %s47, 1
          %s218 = scalar_lea.sflag [#allocation3], %s217
          %s219 = sand.u32 %s47, 1
          %s220 = smul.addr %s219, 16
          %s221 = scalar_lea.vmem [#allocation2], %s220
          %s222 = smul.u32 2, %s31
          %224 = vsyncadd %s218, 0
          %s225 = smul.addr %s30, 2
          %s226 = sadd.s32 %s222, %s225
          %s227 = smul.addr %s226, 8
          %s228 = scalar_lea.hbm %s0, %s227
          %s229 = sshll.u32 %s228, 4
          %s230 = int_to_ptr.hbm [resolvable:$true] %s229
          %s231 = sshll.u32 %s221, 4
          %s232 = int_to_ptr.vmem [resolvable:$true] %s231
          %237 = dma.hbm_to_vmem [thread:$0]  %s230, 256, %s232, %s218, 128, 128, 8
        $region20: #{tpu_custom_call.1} parent=15 // pred_fallthru
          _
        // Predicated region
        $region21: #{tpu_custom_call.1} parent=15 // pred_check
          %p238 = pneg %p83
        $region22: #{tpu_custom_call.1} parent=15 // pred_check_branch
          %240 = sbr.rel (%p238) target = $region24
        $region23: #{tpu_custom_call.1} parent=15 // pred_region
          %s241 = sand.u32 %s23, 1
          %s242 = scalar_lea.sflag [#allocation6], %s241
          %s243 = sand.u32 %s73, 1
          %s244 = smul.addr %s243, 128
          %s245 = scalar_lea.vmem [#allocation5], %s244
          %247 = vsyncadd %s242, 0
          %s248 = smul.addr %s30, 16
          %s249 = smul.addr %s248, 8
          %s250 = scalar_lea.hbm %s1, %s249
          %s251 = sshll.u32 %s250, 4
          %s252 = int_to_ptr.hbm [resolvable:$true] %s251
          %s253 = sshll.u32 %s245, 4
          %s254 = int_to_ptr.vmem [resolvable:$true] %s253
          %259 = dma.hbm_to_vmem [thread:$0]  %s252, 2048, %s254, %s242, 128, 128, 8
        $region24: #{tpu_custom_call.1} parent=15 // pred_fallthru
          _
        // Predicated region
        $region25: #{tpu_custom_call.1} parent=15 // pred_check
          %p260 = pneg %p109
        $region26: #{tpu_custom_call.1} parent=15 // pred_check_branch
          %262 = sbr.rel (%p260) target = $region28
        $region27: #{tpu_custom_call.1} parent=15 // pred_region
          %s263 = sand.u32 %s23, 1
          %s264 = scalar_lea.sflag [#allocation6], %s263
          %s265 = sand.u32 %s99, 1
          %s266 = scalar_lea.vmem [#allocation7], %s265
          %268 = vsyncadd %s264, 0
          %s269 = scalar_lea.hbm %s2, %s30
          %s271 = sshll.u32 %s269, 4
          %s272 = int_to_ptr.hbm [resolvable:$true] %s271
          %s273 = sshll.u32 %s266, 4
          %s274 = int_to_ptr.vmem [resolvable:$true] %s273
          %276 = dma.hbm_to_vmem [thread:$0]  %s272, 16, %s274, %s264
        $region28: #{tpu_custom_call.1} parent=15 // pred_fallthru
          _
        // Predicated region
        $region29: #{tpu_custom_call.1} parent=15 // pred_check
          %p277 = pneg %p135
        $region30: #{tpu_custom_call.1} parent=15 // pred_check_branch
          %279 = sbr.rel (%p277) target = $region32
        $region31: #{tpu_custom_call.1} parent=15 // pred_region
          %s280 = sand.u32 %s125, 1
          %s281 = scalar_lea.sflag [#allocation9], %s280
          %s282 = sand.u32 %s125, 1
          %s283 = smul.addr %s282, 128
          %s284 = scalar_lea.vmem [#allocation8], %s283
          %286 = vsyncadd %s281, 0
          %s287 = smul.addr %s30, 16
          %s288 = smul.addr %s287, 8
          %s289 = scalar_lea.hbm %s3, %s288
          %s290 = sshll.u32 %s289, 4
          %s291 = int_to_ptr.hbm [resolvable:$true] %s290
          %s292 = sshll.u32 %s284, 4
          %s293 = int_to_ptr.vmem [resolvable:$true] %s292
          %298 = dma.hbm_to_vmem [thread:$0]  %s291, 2048, %s293, %s281, 128, 128, 8
        $region32: #{tpu_custom_call.1} parent=15 // pred_fallthru
          _
        // Predicated region
        $region33: #{tpu_custom_call.1} parent=15 // pred_check
          %p299 = pneg %p161
        $region34: #{tpu_custom_call.1} parent=15 // pred_check_branch
          %301 = sbr.rel (%p299) target = $region36
        $region35: #{tpu_custom_call.1} parent=15 // pred_region
          %p302 = scmp.lt.s32.totalorder %s30, 1
          %s303 = scalar_select %p302, %s30, 1
          %s304 = scalar_lea.vmem %s4, %s303
        $region36: #{tpu_custom_call.1} parent=15 // pred_fallthru
          _
      $region16: #{tpu_custom_call.1} parent=5 // pred_fallthru
        _
      %p305 = scmp.le.s32.totalorder 1, %s23
      %p306 = scmp.lt.s32.totalorder %s23, 3
      %p307 = pnand %p305, %p306
      %p308 = pneg %p307
      // Predicated region
      $region37: #{tpu_custom_call.1} parent=5 // pred_check
        _
      $region38: #{tpu_custom_call.1} parent=5 // pred_check_branch
        %310 = sbr.rel (%p307) target = $region40
      $region39: #{tpu_custom_call.1} parent=5 // pred_region
        %s311 = ssub.s32 %s23, 1
        %s312 = sand.u32 %s50, 1
        %s313 = scalar_lea.sflag [#allocation3], %s312
        %s314 = sand.u32 %s50, 1
        %s315 = smul.addr %s314, 16
        %s316 = scalar_lea.vmem [#allocation2], %s315
        // Predicated region
        $region41: #{tpu_custom_call.1} parent=39 // pred_check
          %p317 = pneg %p63
        $region42: #{tpu_custom_call.1} parent=39 // pred_check_branch
          %319 = sbr.rel (%p317) target = $region44
        $region43: #{tpu_custom_call.1} parent=39 // pred_region
          %321 = dma.done %s313, 256
        $region44: #{tpu_custom_call.1} parent=39 // pred_fallthru
          _
        %s322 = sand.u32 %s28, 1
        %s323 = scalar_lea.sflag [#allocation6], %s322
        %s324 = sand.u32 %s76, 1
        %s325 = smul.addr %s324, 128
        %s326 = scalar_lea.vmem [#allocation5], %s325
        // Predicated region
        $region45: #{tpu_custom_call.1} parent=39 // pred_check
          %p327 = pneg %p89
        $region46: #{tpu_custom_call.1} parent=39 // pred_check_branch
          %329 = sbr.rel (%p327) target = $region48
        $region47: #{tpu_custom_call.1} parent=39 // pred_region
          %331 = dma.done %s323, 2048
        $region48: #{tpu_custom_call.1} parent=39 // pred_fallthru
          _
        %s332 = sand.u32 %s28, 1
        %s333 = scalar_lea.sflag [#allocation6], %s332
        %s334 = sand.u32 %s102, 1
        %s335 = scalar_lea.vmem [#allocation7], %s334
        // Predicated region
        $region49: #{tpu_custom_call.1} parent=39 // pred_check
          %p336 = pneg %p115
        $region50: #{tpu_custom_call.1} parent=39 // pred_check_branch
          %338 = sbr.rel (%p336) target = $region52
        $region51: #{tpu_custom_call.1} parent=39 // pred_region
          %340 = dma.done %s333, 16
        $region52: #{tpu_custom_call.1} parent=39 // pred_fallthru
          _
        %s341 = sand.u32 %s128, 1
        %s342 = scalar_lea.sflag [#allocation9], %s341
        %s343 = sand.u32 %s128, 1
        %s344 = smul.addr %s343, 128
        %s345 = scalar_lea.vmem [#allocation8], %s344
        // Predicated region
        $region53: #{tpu_custom_call.1} parent=39 // pred_check
          %p346 = pneg %p141
        $region54: #{tpu_custom_call.1} parent=39 // pred_check_branch
          %348 = sbr.rel (%p346) target = $region56
        $region55: #{tpu_custom_call.1} parent=39 // pred_region
          %350 = dma.done %s342, 2048
        $region56: #{tpu_custom_call.1} parent=39 // pred_fallthru
          _
        %s351 = sand.u32 %s50, 1
        %s352 = scalar_lea.sflag [#allocation3], %s351
        %s353 = sand.u32 %s50, 1
        %s354 = smul.addr %s353, 16
        %s355 = scalar_lea.vmem [#allocation2], %s354
        %p356 = pneg %p63
        %p357 = pneg %p60
        %s358 = sand.u32 %s28, 1
        %s359 = scalar_lea.sflag [#allocation6], %s358
        %s360 = sand.u32 %s76, 1
        %s361 = smul.addr %s360, 128
        %s362 = scalar_lea.vmem [#allocation5], %s361
        %p363 = pneg %p89
        %p364 = pneg %p86
        %s365 = sand.u32 %s28, 1
        %s366 = scalar_lea.sflag [#allocation6], %s365
        %s367 = sand.u32 %s102, 1
        %s368 = scalar_lea.vmem [#allocation7], %s367
        %p369 = pneg %p115
        %p370 = pneg %p112
        %s371 = sand.u32 %s128, 1
        %s372 = scalar_lea.sflag [#allocation9], %s371
        %s373 = sand.u32 %s128, 1
        %s374 = smul.addr %s373, 128
        %s375 = scalar_lea.vmem [#allocation8], %s374
        %p376 = pneg %p141
        %p377 = pneg %p138
        %p378 = scmp.lt.s32.totalorder %s32, 1
        %s379 = scalar_select %p378, %s32, 1
        %s380 = scalar_lea.vmem %s4, %s379
        %p381 = pneg %p167
        %p382 = pneg %p164
        %p383 = pneg %p195
        %p384 = pneg %p192
        %s385 = sand.u32 %s182, 1
        %s386 = scalar_lea.sflag [#allocation4], %s385
        %s387 = sand.u32 %s182, 1
        %s388 = smul.addr %s387, 16
        %s389 = scalar_lea.vmem [#allocation10], %s388
        %s390 = smul.u32 2, %s33
        %p391 = scmp.lt.s32.totalorder %s32, 1
        %s392 = scalar_select %p391, %s32, 1
        %s393 = scalar_lea.vmem %s4, %s392
        %s394 = smul.u32 2, %s33
        %v395 = vld [vmem:[%s316] sm:$0xff]
        %v396 = vld [vmem:[%s316 + $0x8] sm:$0xff]
        %v397 = vld [vmem:[%s326] sm:$0xff]
        %v398 = vld [vmem:[%s326 + $0x8] sm:$0xff]
        %v399 = vld [vmem:[%s326 + $0x10] sm:$0xff]
        %v400 = vld [vmem:[%s326 + $0x18] sm:$0xff]
        %v401 = vld [vmem:[%s326 + $0x20] sm:$0xff]
        %v402 = vld [vmem:[%s326 + $0x28] sm:$0xff]
        %v403 = vld [vmem:[%s326 + $0x30] sm:$0xff]
        %v404 = vld [vmem:[%s326 + $0x38] sm:$0xff]
        %v405 = vld [vmem:[%s326 + $0x40] sm:$0xff]
        %v406 = vld [vmem:[%s326 + $0x48] sm:$0xff]
        %v407 = vld [vmem:[%s326 + $0x50] sm:$0xff]
        %v408 = vld [vmem:[%s326 + $0x58] sm:$0xff]
        %v409 = vld [vmem:[%s326 + $0x60] sm:$0xff]
        %v410 = vld [vmem:[%s326 + $0x68] sm:$0xff]
        %v411 = vld [vmem:[%s326 + $0x70] sm:$0xff]
        %v412 = vld [vmem:[%s326 + $0x78] sm:$0xff]
        %v413 = vld [vmem:[%s335] sm:$0x1]
        %v415 = vperm.slane %v413, 0
        %417 = vmatpush.msra.mxu0 %v412
        %418 = vmatpush.msra.mxu0 %v411
        %419 = vmatpush.msra.mxu0 %v410
        %420 = vmatpush.msra.mxu0 %v409
        %421 = vmatpush.msra.mxu0 %v408
        %422 = vmatpush.msra.mxu0 %v407
        %423 = vmatpush.msra.mxu0 %v406
        %424 = vmatpush.msra.mxu0 %v405
        %425 = vmatpush.msra.mxu0 %v404
        %426 = vmatpush.msra.mxu0 %v403
        %427 = vmatpush.msra.mxu0 %v402
        %428 = vmatpush.msra.mxu0 %v401
        %429 = vmatpush.msra.mxu0 %v400
        %430 = vmatpush.msra.mxu0 %v399
        %431 = vmatpush.msra.mxu0 %v398
        %432 = vmatpush.msra.mxu0 %v397
        %433 = vmatmul.f32.gmra.mxu0 %v395
        %v434 = vpop.f32.mrf.mxu0
        %v435 = vadd.f32 %v415, %v434
        %436 = vmatmul.f32.gmra.mxu0 %v396
        %v437 = vpop.f32.mrf.mxu0
        %v438 = vadd.f32 %v415, %v437
        %439 = vdwg.mxu0
        %vm440 = vcmp.gt.f32.partialorder %v435, 0.0
        %vm441 = vcmp.gt.f32.partialorder %v438, 0.0
        %v442 = vmul.f32 %v435, 0.01
        %v443 = vmul.f32 %v438, 0.01
        %v444 = vsel %vm440, %v435, %v442
        %v445 = vsel %vm441, %v438, %v443
        %v446 = vld [vmem:[%s345] sm:$0xff]
        %v447 = vld [vmem:[%s345 + $0x8] sm:$0xff]
        %v448 = vld [vmem:[%s345 + $0x10] sm:$0xff]
        %v449 = vld [vmem:[%s345 + $0x18] sm:$0xff]
        %v450 = vld [vmem:[%s345 + $0x20] sm:$0xff]
        %v451 = vld [vmem:[%s345 + $0x28] sm:$0xff]
        %v452 = vld [vmem:[%s345 + $0x30] sm:$0xff]
        %v453 = vld [vmem:[%s345 + $0x38] sm:$0xff]
        %v454 = vld [vmem:[%s345 + $0x40] sm:$0xff]
        %v455 = vld [vmem:[%s345 + $0x48] sm:$0xff]
        %v456 = vld [vmem:[%s345 + $0x50] sm:$0xff]
        %v457 = vld [vmem:[%s345 + $0x58] sm:$0xff]
        %v458 = vld [vmem:[%s345 + $0x60] sm:$0xff]
        %v459 = vld [vmem:[%s345 + $0x68] sm:$0xff]
        %v460 = vld [vmem:[%s345 + $0x70] sm:$0xff]
        %v461 = vld [vmem:[%s345 + $0x78] sm:$0xff]
        %v462 = vld [vmem:[%s393] sm:$0x1]
        %v464 = vperm.slane %v462, 0
        %466 = vmatpush.msra.mxu0 %v461
        %467 = vmatpush.msra.mxu0 %v460
        %468 = vmatpush.msra.mxu0 %v459
        %469 = vmatpush.msra.mxu0 %v458
        %470 = vmatpush.msra.mxu0 %v457
        %471 = vmatpush.msra.mxu0 %v456
        %472 = vmatpush.msra.mxu0 %v455
        %473 = vmatpush.msra.mxu0 %v454
        %474 = vmatpush.msra.mxu0 %v453
        %475 = vmatpush.msra.mxu0 %v452
        %476 = vmatpush.msra.mxu0 %v451
        %477 = vmatpush.msra.mxu0 %v450
        %478 = vmatpush.msra.mxu0 %v449
        %479 = vmatpush.msra.mxu0 %v448
        %480 = vmatpush.msra.mxu0 %v447
        %481 = vmatpush.msra.mxu0 %v446
        %482 = vmatmul.f32.gmra.mxu0 %v444
        %v483 = vpop.f32.mrf.mxu0
        %v484 = vadd.f32 %v464, %v483
        %485 = vmatmul.f32.gmra.mxu0 %v445
        %v486 = vpop.f32.mrf.mxu0
        %v487 = vadd.f32 %v464, %v486
        %488 = vdwg.mxu0
        %489 = vst [vmem:[%s389] sm:$0xff] %v484
        %490 = vst [vmem:[%s389 + $0x8] sm:$0xff] %v487
        %s491 = sand.u32 %s182, 1
        %s492 = scalar_lea.sflag [#allocation4], %s491
        %s493 = sand.u32 %s182, 1
        %s494 = smul.addr %s493, 16
        %s495 = scalar_lea.vmem [#allocation10], %s494
        // Predicated region
        $region57: #{tpu_custom_call.1} parent=39 // pred_check
          %p496 = pneg %p192
        $region58: #{tpu_custom_call.1} parent=39 // pred_check_branch
          %498 = sbr.rel (%p496) target = $region60
        $region59: #{tpu_custom_call.1} parent=39 // pred_region
          %s499 = smul.u32 2, %s33
          %501 = vsyncadd %s492, 0
          %s502 = smul.addr %s32, 2
          %s503 = sadd.s32 %s499, %s502
          %s504 = smul.addr %s503, 8
          %s505 = scalar_lea.hbm %s5, %s504
          %s506 = sshll.u32 %s495, 4
          %s507 = int_to_ptr.vmem [resolvable:$true] %s506
          %s508 = sshll.u32 %s505, 4
          %s509 = int_to_ptr.hbm [resolvable:$true] %s508
          %514 = dma.vmem_to_hbm [thread:$0]  %s507, 256, %s509, %s492, 128, 128, 8
        $region60: #{tpu_custom_call.1} parent=39 // pred_fallthru
          _
      $region40: #{tpu_custom_call.1} parent=5 // pred_fallthru
        _
      %p515 = scmp.le.s32.totalorder 2, %s23
      // Predicated region
      $region61: #{tpu_custom_call.1} parent=5 // pred_check
        %p516 = pneg %p515
      $region62: #{tpu_custom_call.1} parent=5 // pred_check_branch
        %518 = sbr.rel (%p516) target = $region64
      $region63: #{tpu_custom_call.1} parent=5 // pred_region
        %s519 = ssub.s32 %s23, 2
        // Predicated region
        $region65: #{tpu_custom_call.1} parent=63 // pred_check
          %p520 = pneg %p198
        $region66: #{tpu_custom_call.1} parent=63 // pred_check_branch
          %522 = sbr.rel (%p520) target = $region68
        $region67: #{tpu_custom_call.1} parent=63 // pred_region
          %s523 = sand.u32 %s183, 1
          %s524 = scalar_lea.sflag [#allocation4], %s523
          %s525 = sand.u32 %s183, 1
          %s526 = smul.addr %s525, 16
          %s527 = scalar_lea.vmem [#allocation10], %s526
          %529 = dma.done %s524, 256
        $region68: #{tpu_custom_call.1} parent=63 // pred_fallthru
          _
      $region64: #{tpu_custom_call.1} parent=5 // pred_fallthru
        _
    $region6: #{tpu_custom_call.1} parent=1 // loop_footer
      %s27 = sadd.s32 1, %s23
    $region7: #{tpu_custom_call.1} parent=1 // loop_footer_branch
      %22 = sbr.rel target = $region3
    $region8: #{tpu_custom_call.1} parent=1 // loop_exit
      _
    %530 = vsyncpa [#allocation3], 1
    %s531 = scalar_lea.sflag [#allocation3], 1
    %532 = vsyncpa %s531, 1
    %533 = vsyncpa [#allocation6], 1
    %s534 = scalar_lea.sflag [#allocation6], 1
    %535 = vsyncpa %s534, 1
    %536 = vsyncpa [#allocation9], 1
    %s537 = scalar_lea.sflag [#allocation9], 1
    %538 = vsyncpa %s537, 1
    %539 = vsyncpa [#allocation4], 1
    %s540 = scalar_lea.sflag [#allocation4], 1
    %541 = vsyncpa %s540, 1

</llo_original>
